<compile_context>
chip_gen: v6e
topology: v6e:2x2x1
jax: 0.10.0
libtpu: 0.0.40
codegen_flags: <defaults>
</compile_context>

<pallas_src>
import jax
import jax.numpy as jnp
import numpy as np
from jax.experimental import pallas as pl
from jax.experimental.pallas import tpu as pltpu

ATTN_DIM = 64  # self.dim in the PyTorch module


def _round_up(x, m):
    return ((x + m - 1) // m) * m


def _attn_agg_kernel(users_ref, gproj_ref, out_ref):
    # users_ref: (TB, L, E) native dtype; gproj_ref: (TB, E) native dtype,
    # already scaled by 1/sqrt(D).
    users = users_ref[...]                                  # (TB, L, E), native dtype
    g = gproj_ref[...]                                      # (TB, E),    native dtype

    # scores[b, l] = sum_e users[b, l, e] * gproj[b, e]   (f32 accumulation)
    scores = jnp.sum(users * g[:, None, :], axis=-1, dtype=jnp.float32)   # (TB, L)

    # numerically stable softmax over L (f32 throughout)
    m = jnp.max(scores, axis=-1, keepdims=True)
    e = jnp.exp(scores - m)
    denom = jnp.sum(e, axis=-1, keepdims=True)
    w = e * pl.reciprocal(denom, approx=True)               # (TB, L) f32

    # out[b, e] = sum_l w[b, l] * users[b, l, e]           (f32 accumulation)
    wv = w.astype(users.dtype)[:, :, None]                  # (TB, L, 1)
    out = jnp.sum(users * wv, axis=1, dtype=jnp.float32)    # (TB, E)
    out_ref[...] = out.astype(out_ref.dtype)


def attention_aggregator(users_emb, group_emb, wq, wk, *, batch_tile=512):
    """users_emb: [B, L, E], group_emb: [B, E], wq/wk: [E, D] -> [B, E]."""
    B, L, E = users_emb.shape
    D = wq.shape[1]
    assert group_emb.shape == (B, E)
    assert wq.shape == (E, D) and wk.shape == (E, D)

    # ---- fold the q/k projections outside the kernel (tiny XLA matmuls) ----
    scale = 1.0 / np.sqrt(float(D))
    gproj = ((group_emb.astype(jnp.float32) @ wq.astype(jnp.float32))
             @ wk.astype(jnp.float32).T) * scale            # [B, E], f32
    gproj = gproj.astype(users_emb.dtype)                   # halves DMA for bf16

    # ---- VMEM high-water estimate per batch row ----
    itemsize = jnp.dtype(users_emb.dtype).itemsize
    bytes_per_row = (2 * L * E * itemsize      # users slab, double-buffered
                     + 4 * E * itemsize        # gproj + out blocks, double-buffered
                     + L * E * 4               # broadcast-product / reduce temp (f32)
                     + 4 * L * 4 + E * 4)      # scores/exp/w vectors + f32 out row
    bytes_per_row = int(bytes_per_row * 1.25)  # layout / padding margin

    # ---- generation-aware VMEM budget (v7x: 64 MiB/TC, v5e/v6e: 128 MiB) ----
    try:
        vmem_cap = int(getattr(pltpu.get_tpu_info(), "vmem_capacity_bytes",
                               64 << 20))
    except Exception:  # pragma: no cover - conservative fallback
        vmem_cap = 64 << 20
    vmem_budget = (48 << 20) if vmem_cap >= (96 << 20) else (24 << 20)

    # ---- batch tile: multiple of 8 sublanes, VMEM-capped, >= ~4 grid steps
    #      so the "parallel" axis can shard across TensorCores on v7x ----
    tb_cap = max(8, (vmem_budget // max(bytes_per_row, 1)) // 8 * 8)
    tb_steps = max(8, _round_up(pl.cdiv(B, 4), 8))
    tb = max(8, min(int(batch_tile), _round_up(B, 8), tb_cap, tb_steps) // 8 * 8)

    grid = pl.cdiv(B, tb)  # ragged tail handled by Pallas edge-block padding;
                           # rows are independent and the OOB part of the
                           # output block write is discarded.

    vmem_limit = int(min(max(tb * bytes_per_row + (8 << 20), 32 << 20),
                         vmem_cap - (4 << 20)))

    cost = pl.CostEstimate(
        flops=4 * B * L * E,
        transcendentals=B * L,
        bytes_accessed=B * L * E * itemsize + 2 * B * E * itemsize)

    out = pl.pallas_call(
        _attn_agg_kernel,
        out_shape=jax.ShapeDtypeStruct((B, E), users_emb.dtype),
        grid_spec=pltpu.PrefetchScalarGridSpec(
            num_scalar_prefetch=0,
            grid=(grid,),
            in_specs=[
                pl.BlockSpec((tb, L, E), lambda i: (i, 0, 0)),  # users slab
                pl.BlockSpec((tb, E), lambda i: (i, 0)),        # folded gproj
            ],
            out_specs=pl.BlockSpec((tb, E), lambda i: (i, 0)),
        ),
        compiler_params=pltpu.CompilerParams(
            dimension_semantics=("parallel",),
            vmem_limit_bytes=vmem_limit),
        cost_estimate=cost,
    )(users_emb, gproj)
    return out


def _xavier_uniform(key, fan_in, fan_out, dtype=jnp.float32):
    bound = float(np.sqrt(6.0 / (fan_in + fan_out)))
    return jax.random.uniform(key, (fan_in, fan_out), dtype=dtype,
                              minval=-bound, maxval=bound)


def _reference(users_emb, group_emb, wq, wk):
    D = wq.shape[1]
    q = group_emb @ wq                                   # [B, D]
    k = jnp.einsum('ble,ed->bld', users_emb, wk)         # [B, L, D]
    attn = jnp.einsum('bd,bld->bl', q, k) / np.sqrt(float(D))
    w = jax.nn.softmax(attn, axis=1)
    return jnp.einsum('bl,ble->be', w, users_emb)        # [B, E]


if __name__ == "__main__":
    B, L, E = 2, 8, 32  # batch, group members, emb_dim

    key = jax.random.PRNGKey(0)
    k_u, k_g, k_wq, k_wk = jax.random.split(key, 4)

    users_emb = jax.random.normal(k_u, (B, L, E), dtype=jnp.float32)
    group_emb = jax.random.normal(k_g, (B, E), dtype=jnp.float32)
    wq = _xavier_uniform(k_wq, E, ATTN_DIM)
    wk = _xavier_uniform(k_wk, E, ATTN_DIM)

    out = attention_aggregator(users_emb, group_emb, wq, wk)
    out = jax.block_until_ready(out)

    ref = _reference(users_emb, group_emb, wq, wk)
    # Slightly loosened tolerance: the folded projection reassociates the
    # contraction and the softmax denominator uses the EUP approx reciprocal.
    np.testing.assert_allclose(np.asarray(out), np.asarray(ref),
                               rtol=2e-3, atol=2e-3)

    print("KERNEL_OK")
</pallas_src>

<mosaic_0001>
module attributes {stable_mosaic.version = 11 : i64} {
  func.func @_attn_agg_kernel(%arg0: i32, %arg1: memref<8x8x32xf32, #tpu.memory_space<vmem>>, %arg2: memref<8x32xf32, #tpu.memory_space<vmem>>, %arg3: memref<8x32xf32, #tpu.memory_space<vmem>>) attributes {dimension_semantics = [#tpu.dimension_semantics<parallel>], iteration_bounds = array<i64: 1>, scalar_prefetch = 0 : i64, scratch_operands = 0 : i64, tpu.core_type = #tpu.core_type<tc>, window_params = [{transform_indices = @transform_0, window_bounds = array<i64: 8, 8, 32>}, {transform_indices = @transform_1, window_bounds = array<i64: 8, 32>}, {transform_indices = @transform_2, window_bounds = array<i64: 8, 32>}]} {
    %c0 = arith.constant 0 : index
    %c0_0 = arith.constant 0 : index
    %c0_1 = arith.constant 0 : index
    %0 = vector.load %arg1[%c0, %c0_0, %c0_1] : memref<8x8x32xf32, #tpu.memory_space<vmem>>, vector<8x8x32xf32>
    %c0_2 = arith.constant 0 : index
    %c0_3 = arith.constant 0 : index
    %1 = vector.load %arg2[%c0_2, %c0_3] : memref<8x32xf32, #tpu.memory_space<vmem>>, vector<8x32xf32>
    %2 = vector.shape_cast %1 : vector<8x32xf32> to vector<8x1x32xf32>
    %3 = vector.broadcast %2 : vector<8x1x32xf32> to vector<8x8x32xf32>
    %4 = arith.mulf %0, %3 : vector<8x8x32xf32>
    %cst = arith.constant dense<0.000000e+00> : vector<8x8xf32>
    %5 = vector.multi_reduction <add>, %4, %cst [2] : vector<8x8x32xf32> to vector<8x8xf32>
    %cst_4 = arith.constant dense<0xFF800000> : vector<8xf32>
    %6 = vector.multi_reduction <maximumf>, %5, %cst_4 [1] : vector<8x8xf32> to vector<8xf32>
    %7 = vector.shape_cast %6 : vector<8xf32> to vector<8x1xf32>
    %8 = vector.broadcast %7 : vector<8x1xf32> to vector<8x8xf32>
    %9 = arith.subf %5, %8 : vector<8x8xf32>
    %10 = math.exp %9 : vector<8x8xf32>
    %cst_5 = arith.constant dense<0.000000e+00> : vector<8xf32>
    %11 = vector.multi_reduction <add>, %10, %cst_5 [1] : vector<8x8xf32> to vector<8xf32>
    %12 = vector.shape_cast %11 : vector<8xf32> to vector<8x1xf32>
    %13 = tpu.reciprocal %12 {approx = true} : vector<8x1xf32> -> vector<8x1xf32>
    %14 = vector.broadcast %13 : vector<8x1xf32> to vector<8x8xf32>
    %15 = arith.mulf %10, %14 : vector<8x8xf32>
    %16 = vector.shape_cast %15 : vector<8x8xf32> to vector<8x8x1xf32>
    %17 = vector.broadcast %16 : vector<8x8x1xf32> to vector<8x8x32xf32>
    %18 = arith.mulf %0, %17 : vector<8x8x32xf32>
    %cst_6 = arith.constant dense<0.000000e+00> : vector<8x32xf32>
    %19 = vector.multi_reduction <add>, %18, %cst_6 [1] : vector<8x8x32xf32> to vector<8x32xf32>
    %c0_7 = arith.constant 0 : index
    %c0_8 = arith.constant 0 : index
    %20 = vector.load %arg3[%c0_7, %c0_8] : memref<8x32xf32, #tpu.memory_space<vmem>>, vector<8x32xf32>
    tpu.vector_store %arg3[%c0_7, %c0_8], %19 {strides = array<i32>} : memref<8x32xf32, #tpu.memory_space<vmem>>, vector<8x32xf32>,
    return
  }
  func.func @transform_0(%arg0: i32) -> (i32, i32, i32) {
    %c0_i32 = arith.constant 0 : i32
    %c0_i32_0 = arith.constant 0 : i32
    %c0_i32_1 = arith.constant 0 : i32
    return %arg0, %c0_i32, %c0_i32_0 : i32, i32, i32
  }
  func.func @transform_1(%arg0: i32) -> (i32, i32) {
    %c0_i32 = arith.constant 0 : i32
    %c0_i32_0 = arith.constant 0 : i32
    return %arg0, %c0_i32 : i32, i32
  }
  func.func @transform_2(%arg0: i32) -> (i32, i32) {
    %c0_i32 = arith.constant 0 : i32
    %c0_i32_0 = arith.constant 0 : i32
    return %arg0, %c0_i32 : i32, i32
  }
}

</mosaic_0001>

<llo_original>
// kernel: tpu_custom_call.1
$region0: #{tpu_custom_call.1}
  #allocation0 [shape = 'u32[]', space=smem, size = 0x4, offset = 0x4, fixed_abs, tag = 'smem constant byte address 0x4 - core index']
  #allocation1 [shape = 'u32[144,128]{1,0:T(1,128)}', space=vmem, size = 0x12000, scoped, tag = 'internal scratch']
  %s0 = inlined_call_operand.hbm [shape: f32[2,8,32], index: 0, kind: input, shape index: {}]
  %s1 = inlined_call_operand.hbm [shape: f32[2,32], index: 1, kind: input, shape index: {}]
  %s2 = inlined_call_operand.hbm [shape: f32[2,32], index: 2, kind: output, shape index: {}]
  %s3 = sld [smem:[#allocation0]]
  $region26: #{tpu_custom_call.1} parent=0
    _
  %s5 = ssub.s32 1, %s3
  %s6 = scalar_select 0, %s5, %s3
  $region1: #{tpu_custom_call.1} parent=0
    #allocation2 [shape = 'u8[32768]{0}', space=vmem, size = 0x8000, scoped, tag = 'input window, operand 0, single buffered']
    #allocation3 [shape = 's32[1]{0}', space=sflag, size = 0x4, scoped, tag = 'scoped memory for tpu_custom_call.1']
    #allocation4 [shape = 's32[1]{0}', space=sflag, size = 0x4, scoped, tag = 'scoped memory for tpu_custom_call.1']
    #allocation5 [shape = 'u8[4096]{0}', space=vmem, size = 0x1000, scoped, tag = 'input window, operand 1, single buffered']
    #allocation6 [shape = 's32[1]{0}', space=sflag, size = 0x4, scoped, tag = 'scoped memory for tpu_custom_call.1']
    #allocation7 [shape = 'u8[4096]{0}', space=vmem, size = 0x1000, scoped, tag = 'output window, operand 0, single buffered']
    %7 = vsyncpa [#allocation3], 0
    %8 = vsyncpa [#allocation6], 0
    %9 = vsyncpa [#allocation4], 0
    // Predicated region
    $region2: #{tpu_custom_call.1} parent=1 // pred_check
      _
    $region3: #{tpu_custom_call.1} parent=1 // pred_check_branch
      %11 = sbr.rel (0) target = $region5
    $region4: #{tpu_custom_call.1} parent=1 // pred_region
      %s13 = ssub.s32 1024, 256
      %14 = vsyncadd [#allocation3], %s13
      %s15 = sshll.u32 [#allocation2], 4
      %s16 = int_to_ptr.vmem [resolvable:$true] %s15
      %21 = dma.hbm_to_vmem [thread:$0]  %s0, 256, %s16, [#allocation3], 128, 128, 8
    $region5: #{tpu_custom_call.1} parent=1 // pred_fallthru
      _
    // Predicated region
    $region6: #{tpu_custom_call.1} parent=1 // pred_check
      _
    $region7: #{tpu_custom_call.1} parent=1 // pred_check_branch
      %23 = sbr.rel (0) target = $region9
    $region8: #{tpu_custom_call.1} parent=1 // pred_region
      %s25 = ssub.s32 128, 32
      %26 = vsyncadd [#allocation6], %s25
      %s27 = sshll.u32 [#allocation5], 4
      %s28 = int_to_ptr.vmem [resolvable:$true] %s27
      %33 = dma.hbm_to_vmem [thread:$0]  %s1, 32, %s28, [#allocation6], 32, 32, 2
    $region9: #{tpu_custom_call.1} parent=1 // pred_fallthru
      _
    // Predicated region
    $region10: #{tpu_custom_call.1} parent=1 // pred_check
      _
    $region11: #{tpu_custom_call.1} parent=1 // pred_check_branch
      %35 = sbr.rel (0) target = $region13
    $region12: #{tpu_custom_call.1} parent=1 // pred_region
      %36 = dma.done [#allocation3], 1024
    $region13: #{tpu_custom_call.1} parent=1 // pred_fallthru
      _
    // Predicated region
    $region14: #{tpu_custom_call.1} parent=1 // pred_check
      _
    $region15: #{tpu_custom_call.1} parent=1 // pred_check_branch
      %38 = sbr.rel (0) target = $region17
    $region16: #{tpu_custom_call.1} parent=1 // pred_region
      %39 = dma.done [#allocation6], 128
    $region17: #{tpu_custom_call.1} parent=1 // pred_fallthru
      _
    %v40 = vld [vmem:[#allocation2] sm:$0xff]
    %v41 = vld [vmem:[#allocation2 + $0x8] sm:$0xff]
    %v42 = vld [vmem:[#allocation2 + $0x10] sm:$0xff]
    %v43 = vld [vmem:[#allocation2 + $0x18] sm:$0xff]
    %v44 = vld [vmem:[#allocation2 + $0x20] sm:$0xff]
    %v45 = vld [vmem:[#allocation2 + $0x28] sm:$0xff]
    %v46 = vld [vmem:[#allocation2 + $0x30] sm:$0xff]
    %v47 = vld [vmem:[#allocation2 + $0x38] sm:$0xff]
    %v48 = vld [vmem:[#allocation5] sm:$0xff]
    %v50 = vcombine.high %v48, %v48
    %v52 = vunpack.c.l.s4 1966171168
    %v53 = vunpack.c.0.s8 %v52
    %v54 = vlaneseq
    %v55 = vshrl.u32 %v54, 7
    %v56 = vsub.s32 %v53, %v55
    %v57 = vrot.slane %v48, %v56
    %v59 = vunpack.c.l.s4 1966171168
    %v60 = vunpack.c.0.s8 %v59
    %v61 = vlaneseq
    %v62 = vshrl.u32 %v61, 7
    %v63 = vsub.s32 %v60, %v62
    %v64 = vrot.slane %v50, %v63
    %v65 = vcombine.high %v57, %v57
    %v66 = vcombine.high %v64, %v64
    %v68 = vunpack.c.l.s4 1966171168
    %v69 = vunpack.c.0.s8 %v68
    %v70 = vlaneseq
    %v71 = vshrl.u32 %v70, 7
    %v72 = vsub.s32 %v69, %v71
    %v73 = vrot.slane %v57, %v72
    %v75 = vunpack.c.l.s4 1966171168
    %v76 = vunpack.c.0.s8 %v75
    %v77 = vlaneseq
    %v78 = vshrl.u32 %v77, 7
    %v79 = vsub.s32 %v76, %v78
    %v80 = vrot.slane %v64, %v79
    %v82 = vunpack.c.l.s4 1966171168
    %v83 = vunpack.c.0.s8 %v82
    %v84 = vlaneseq
    %v85 = vshrl.u32 %v84, 7
    %v86 = vsub.s32 %v83, %v85
    %v87 = vrot.slane %v65, %v86
    %v89 = vunpack.c.l.s4 1966171168
    %v90 = vunpack.c.0.s8 %v89
    %v91 = vlaneseq
    %v92 = vshrl.u32 %v91, 7
    %v93 = vsub.s32 %v90, %v92
    %v94 = vrot.slane %v66, %v93
    %v95 = vcombine.high %v73, %v73
    %v96 = vcombine.high %v80, %v80
    %v97 = vcombine.high %v87, %v87
    %v98 = vcombine.high %v94, %v94
    %v99 = vlaneseq
    %v100 = vshrl.u32 %v99, 7
    %v101 = vsub.s32 0, %v100
    %v102 = vrot.slane %v73, %v101
    %v103 = vlaneseq
    %v104 = vshrl.u32 %v103, 7
    %v105 = vsub.s32 0, %v104
    %v106 = vrot.slane %v87, %v105
    %v107 = vlaneseq
    %v108 = vshrl.u32 %v107, 7
    %v109 = vsub.s32 0, %v108
    %v110 = vrot.slane %v95, %v109
    %v111 = vlaneseq
    %v112 = vshrl.u32 %v111, 7
    %v113 = vsub.s32 0, %v112
    %v114 = vrot.slane %v97, %v113
    %v115 = vlaneseq
    %v116 = vshrl.u32 %v115, 7
    %v117 = vsub.s32 0, %v116
    %v118 = vrot.slane %v80, %v117
    %v119 = vlaneseq
    %v120 = vshrl.u32 %v119, 7
    %v121 = vsub.s32 0, %v120
    %v122 = vrot.slane %v94, %v121
    %v123 = vlaneseq
    %v124 = vshrl.u32 %v123, 7
    %v125 = vsub.s32 0, %v124
    %v126 = vrot.slane %v96, %v125
    %v127 = vlaneseq
    %v128 = vshrl.u32 %v127, 7
    %v129 = vsub.s32 0, %v128
    %v130 = vrot.slane %v98, %v129
    %v139 = vmul.f32 %v40, %v102
    %v140 = vmul.f32 %v41, %v106
    %v141 = vmul.f32 %v42, %v110
    %v142 = vmul.f32 %v43, %v114
    %v143 = vmul.f32 %v44, %v118
    %v144 = vmul.f32 %v45, %v122
    %v145 = vmul.f32 %v46, %v126
    %v146 = vmul.f32 %v47, %v130
    %vm147 = vcmask 261120
    %v148 = vsel %vm147, %v139, 0.0
    %149 = vadd.xlane.f32.xlu0 %v148
    %v150 = vpop.xlane.xlu0 %149
    %v151 = vsel %vm147, %v140, 0.0
    %152 = vadd.xlane.f32.xlu0 %v151
    %v153 = vpop.xlane.xlu0 %152
    %v154 = vsel %vm147, %v141, 0.0
    %155 = vadd.xlane.f32.xlu0 %v154
    %v156 = vpop.xlane.xlu0 %155
    %v157 = vsel %vm147, %v142, 0.0
    %158 = vadd.xlane.f32.xlu0 %v157
    %v159 = vpop.xlane.xlu0 %158
    %v160 = vsel %vm147, %v143, 0.0
    %161 = vadd.xlane.f32.xlu0 %v160
    %v162 = vpop.xlane.xlu0 %161
    %v163 = vsel %vm147, %v144, 0.0
    %164 = vadd.xlane.f32.xlu0 %v163
    %v165 = vpop.xlane.xlu0 %164
    %v166 = vsel %vm147, %v145, 0.0
    %167 = vadd.xlane.f32.xlu0 %v166
    %v168 = vpop.xlane.xlu0 %167
    %v169 = vsel %vm147, %v146, 0.0
    %170 = vadd.xlane.f32.xlu0 %v169
    %v171 = vpop.xlane.xlu0 %170
    %v180 = vlaneseq
    %v181 = vand.u32 %v180, 127
    %v182 = vlaneseq
    %v183 = vshrl.u32 %v182, 7
    %v184 = vsub.s32 %v181, %v183
    %v185 = vrot.slane %v150, %v184
    %v186 = vlaneseq
    %v187 = vshrl.u32 %v186, 7
    %v188 = vsub.s32 %v181, %v187
    %v189 = vrot.slane %v153, %v188
    %v190 = vlaneseq
    %v191 = vshrl.u32 %v190, 7
    %v192 = vsub.s32 %v181, %v191
    %v193 = vrot.slane %v156, %v192
    %v194 = vlaneseq
    %v195 = vshrl.u32 %v194, 7
    %v196 = vsub.s32 %v181, %v195
    %v197 = vrot.slane %v159, %v196
    %v198 = vlaneseq
    %v199 = vshrl.u32 %v198, 7
    %v200 = vsub.s32 %v181, %v199
    %v201 = vrot.slane %v162, %v200
    %v202 = vlaneseq
    %v203 = vshrl.u32 %v202, 7
    %v204 = vsub.s32 %v181, %v203
    %v205 = vrot.slane %v165, %v204
    %v206 = vlaneseq
    %v207 = vshrl.u32 %v206, 7
    %v208 = vsub.s32 %v181, %v207
    %v209 = vrot.slane %v168, %v208
    %v210 = vlaneseq
    %v211 = vshrl.u32 %v210, 7
    %v212 = vsub.s32 %v181, %v211
    %v213 = vrot.slane %v171, %v212
    %vm214 = vcmask 1041409
    %v215 = vsel %vm214, %v189, %v185
    %vm216 = vcmask 1042434
    %v217 = vsel %vm216, %v193, %v215
    %vm218 = vcmask 1043459
    %v219 = vsel %vm218, %v197, %v217
    %vm220 = vcmask 1044484
    %v221 = vsel %vm220, %v201, %v219
    %vm222 = vcmask 1045509
    %v223 = vsel %vm222, %v205, %v221
    %vm224 = vcmask 1046534
    %v225 = vsel %vm224, %v209, %v223
    %vm226 = vcmask 1047559
    %v227 = vsel %vm226, %v213, %v225
    %vm229 = vcmask 64512
    %v230 = vsel %vm229, %v227, -inf
    %231 = vmax.xlane.f32.xlu0 %v230
    %v232 = vpop.xlane.xlu0 %231
    %v234 = vlaneseq
    %v235 = vshrl.u32 %v234, 7
    %v236 = vsub.s32 0, %v235
    %v237 = vrot.slane %v232, %v236
    %v238 = vlaneseq
    %v239 = vshrl.u32 %v238, 7
    %v240 = vsub.s32 1, %v239
    %v241 = vrot.slane %v232, %v240
    %v242 = vlaneseq
    %v243 = vshrl.u32 %v242, 7
    %v244 = vsub.s32 2, %v243
    %v245 = vrot.slane %v232, %v244
    %v246 = vlaneseq
    %v247 = vshrl.u32 %v246, 7
    %v248 = vsub.s32 3, %v247
    %v249 = vrot.slane %v232, %v248
    %v250 = vlaneseq
    %v251 = vshrl.u32 %v250, 7
    %v252 = vsub.s32 4, %v251
    %v253 = vrot.slane %v232, %v252
    %v254 = vlaneseq
    %v255 = vshrl.u32 %v254, 7
    %v256 = vsub.s32 5, %v255
    %v257 = vrot.slane %v232, %v256
    %v258 = vlaneseq
    %v259 = vshrl.u32 %v258, 7
    %v260 = vsub.s32 6, %v259
    %v261 = vrot.slane %v232, %v260
    %v262 = vlaneseq
    %v263 = vshrl.u32 %v262, 7
    %v264 = vsub.s32 7, %v263
    %v265 = vrot.slane %v232, %v264
    %v274 = vsub.f32 %v150, %v237
    %v275 = vsub.f32 %v153, %v241
    %v276 = vsub.f32 %v156, %v245
    %v277 = vsub.f32 %v159, %v249
    %v278 = vsub.f32 %v162, %v253
    %v279 = vsub.f32 %v165, %v257
    %v280 = vsub.f32 %v168, %v261
    %v281 = vsub.f32 %v171, %v265
    %v282 = vmul.f32 %v274, 1.442695
    %v283 = vpow.pop %v282
    %v284 = vmul.f32 %v275, 1.442695
    %v285 = vpow.pop %v284
    %v286 = vmul.f32 %v276, 1.442695
    %v287 = vpow.pop %v286
    %v288 = vmul.f32 %v277, 1.442695
    %v289 = vpow.pop %v288
    %v290 = vmul.f32 %v278, 1.442695
    %v291 = vpow.pop %v290
    %v292 = vmul.f32 %v279, 1.442695
    %v293 = vpow.pop %v292
    %v294 = vmul.f32 %v280, 1.442695
    %v295 = vpow.pop %v294
    %v296 = vmul.f32 %v281, 1.442695
    %v297 = vpow.pop %v296
    %306 = vset.pattern.permute.xlu0 0
    %307 = vperm.xlu0 %306, %v283
    %v308 = vpop.permute.xlu0 %307
    %309 = vset.pattern.permute.xlu0 0
    %310 = vperm.xlu0 %309, %v285
    %v311 = vpop.permute.xlu0 %310
    %312 = vset.pattern.permute.xlu0 0
    %313 = vperm.xlu0 %312, %v287
    %v314 = vpop.permute.xlu0 %313
    %315 = vset.pattern.permute.xlu0 0
    %316 = vperm.xlu0 %315, %v289
    %v317 = vpop.permute.xlu0 %316
    %318 = vset.pattern.permute.xlu0 0
    %319 = vperm.xlu0 %318, %v291
    %v320 = vpop.permute.xlu0 %319
    %321 = vset.pattern.permute.xlu0 0
    %322 = vperm.xlu0 %321, %v293
    %v323 = vpop.permute.xlu0 %322
    %324 = vset.pattern.permute.xlu0 0
    %325 = vperm.xlu0 %324, %v295
    %v326 = vpop.permute.xlu0 %325
    %327 = vset.pattern.permute.xlu0 0
    %328 = vperm.xlu0 %327, %v297
    %v329 = vpop.permute.xlu0 %328
    %v330 = vlaneseq
    %v331 = vshrl.u32 %v330, 7
    %v332 = vsub.s32 %v181, %v331
    %v333 = vrot.slane %v308, %v332
    %v334 = vlaneseq
    %v335 = vshrl.u32 %v334, 7
    %v336 = vsub.s32 %v181, %v335
    %v337 = vrot.slane %v311, %v336
    %v338 = vlaneseq
    %v339 = vshrl.u32 %v338, 7
    %v340 = vsub.s32 %v181, %v339
    %v341 = vrot.slane %v314, %v340
    %v342 = vlaneseq
    %v343 = vshrl.u32 %v342, 7
    %v344 = vsub.s32 %v181, %v343
    %v345 = vrot.slane %v317, %v344
    %v346 = vlaneseq
    %v347 = vshrl.u32 %v346, 7
    %v348 = vsub.s32 %v181, %v347
    %v349 = vrot.slane %v320, %v348
    %v350 = vlaneseq
    %v351 = vshrl.u32 %v350, 7
    %v352 = vsub.s32 %v181, %v351
    %v353 = vrot.slane %v323, %v352
    %v354 = vlaneseq
    %v355 = vshrl.u32 %v354, 7
    %v356 = vsub.s32 %v181, %v355
    %v357 = vrot.slane %v326, %v356
    %v358 = vlaneseq
    %v359 = vshrl.u32 %v358, 7
    %v360 = vsub.s32 %v181, %v359
    %v361 = vrot.slane %v329, %v360
    %v362 = vsel %vm214, %v337, %v333
    %v363 = vsel %vm216, %v341, %v362
    %v364 = vsel %vm218, %v345, %v363
    %v365 = vsel %vm220, %v349, %v364
    %v366 = vsel %vm222, %v353, %v365
    %v367 = vsel %vm224, %v357, %v366
    %v368 = vsel %vm226, %v361, %v367
    %v370 = vsel %vm229, %v368, 0.0
    %371 = vadd.xlane.f32.xlu0 %v370
    %v372 = vpop.xlane.xlu0 %371
    %v373 = vrcp.pop %v372
    %v375 = vlaneseq
    %v376 = vshrl.u32 %v375, 7
    %v377 = vsub.s32 0, %v376
    %v378 = vrot.slane %v373, %v377
    %v379 = vlaneseq
    %v380 = vshrl.u32 %v379, 7
    %v381 = vsub.s32 1, %v380
    %v382 = vrot.slane %v373, %v381
    %v383 = vlaneseq
    %v384 = vshrl.u32 %v383, 7
    %v385 = vsub.s32 2, %v384
    %v386 = vrot.slane %v373, %v385
    %v387 = vlaneseq
    %v388 = vshrl.u32 %v387, 7
    %v389 = vsub.s32 3, %v388
    %v390 = vrot.slane %v373, %v389
    %v391 = vlaneseq
    %v392 = vshrl.u32 %v391, 7
    %v393 = vsub.s32 4, %v392
    %v394 = vrot.slane %v373, %v393
    %v395 = vlaneseq
    %v396 = vshrl.u32 %v395, 7
    %v397 = vsub.s32 5, %v396
    %v398 = vrot.slane %v373, %v397
    %v399 = vlaneseq
    %v400 = vshrl.u32 %v399, 7
    %v401 = vsub.s32 6, %v400
    %v402 = vrot.slane %v373, %v401
    %v403 = vlaneseq
    %v404 = vshrl.u32 %v403, 7
    %v405 = vsub.s32 7, %v404
    %v406 = vrot.slane %v373, %v405
    %v415 = vmul.f32 %v283, %v378
    %v416 = vmul.f32 %v285, %v382
    %v417 = vmul.f32 %v287, %v386
    %v418 = vmul.f32 %v289, %v390
    %v419 = vmul.f32 %v291, %v394
    %v420 = vmul.f32 %v293, %v398
    %v421 = vmul.f32 %v295, %v402
    %v422 = vmul.f32 %v297, %v406
    %424 = vset.pattern.permute.xlu0 0
    %425 = vperm.xlu0 %424, %v415
    %v426 = vpop.permute.xlu0 %425
    %429 = vset.pattern.permute.xlu0 0
    %430 = vperm.xlu0 %429, %v416
    %v431 = vpop.permute.xlu0 %430
    %434 = vset.pattern.permute.xlu0 0
    %435 = vperm.xlu0 %434, %v417
    %v436 = vpop.permute.xlu0 %435
    %439 = vset.pattern.permute.xlu0 0
    %440 = vperm.xlu0 %439, %v418
    %v441 = vpop.permute.xlu0 %440
    %444 = vset.pattern.permute.xlu0 0
    %445 = vperm.xlu0 %444, %v419
    %v446 = vpop.permute.xlu0 %445
    %449 = vset.pattern.permute.xlu0 0
    %450 = vperm.xlu0 %449, %v420
    %v451 = vpop.permute.xlu0 %450
    %454 = vset.pattern.permute.xlu0 0
    %455 = vperm.xlu0 %454, %v421
    %v456 = vpop.permute.xlu0 %455
    %459 = vset.pattern.permute.xlu0 0
    %460 = vperm.xlu0 %459, %v422
    %v461 = vpop.permute.xlu0 %460
    %v463 = vmul.f32 %v40, %v426
    %v464 = vmul.f32 %v41, %v431
    %v465 = vmul.f32 %v42, %v436
    %v466 = vmul.f32 %v43, %v441
    %v467 = vmul.f32 %v44, %v446
    %v468 = vmul.f32 %v45, %v451
    %v469 = vmul.f32 %v46, %v456
    %v470 = vmul.f32 %v47, %v461
    %v471 = vsel %vm147, %v463, 0.0
    %v472 = vrot.slane %v471, 4
    %v473 = vadd.f32 %v471, %v472
    %v474 = vrot.slane %v473, 2
    %v475 = vadd.f32 %v473, %v474
    %v476 = vrot.slane %v475, 1
    %v477 = vadd.f32 %v475, %v476
    %v478 = vsel %vm147, %v464, 0.0
    %v479 = vrot.slane %v478, 4
    %v480 = vadd.f32 %v478, %v479
    %v481 = vrot.slane %v480, 2
    %v482 = vadd.f32 %v480, %v481
    %v483 = vrot.slane %v482, 1
    %v484 = vadd.f32 %v482, %v483
    %v485 = vsel %vm147, %v465, 0.0
    %v486 = vrot.slane %v485, 4
    %v487 = vadd.f32 %v485, %v486
    %v488 = vrot.slane %v487, 2
    %v489 = vadd.f32 %v487, %v488
    %v490 = vrot.slane %v489, 1
    %v491 = vadd.f32 %v489, %v490
    %v492 = vsel %vm147, %v466, 0.0
    %v493 = vrot.slane %v492, 4
    %v494 = vadd.f32 %v492, %v493
    %v495 = vrot.slane %v494, 2
    %v496 = vadd.f32 %v494, %v495
    %v497 = vrot.slane %v496, 1
    %v498 = vadd.f32 %v496, %v497
    %v499 = vsel %vm147, %v467, 0.0
    %v500 = vrot.slane %v499, 4
    %v501 = vadd.f32 %v499, %v500
    %v502 = vrot.slane %v501, 2
    %v503 = vadd.f32 %v501, %v502
    %v504 = vrot.slane %v503, 1
    %v505 = vadd.f32 %v503, %v504
    %v506 = vsel %vm147, %v468, 0.0
    %v507 = vrot.slane %v506, 4
    %v508 = vadd.f32 %v506, %v507
    %v509 = vrot.slane %v508, 2
    %v510 = vadd.f32 %v508, %v509
    %v511 = vrot.slane %v510, 1
    %v512 = vadd.f32 %v510, %v511
    %v513 = vsel %vm147, %v469, 0.0
    %v514 = vrot.slane %v513, 4
    %v515 = vadd.f32 %v513, %v514
    %v516 = vrot.slane %v515, 2
    %v517 = vadd.f32 %v515, %v516
    %v518 = vrot.slane %v517, 1
    %v519 = vadd.f32 %v517, %v518
    %v520 = vsel %vm147, %v470, 0.0
    %v521 = vrot.slane %v520, 4
    %v522 = vadd.f32 %v520, %v521
    %v523 = vrot.slane %v522, 2
    %v524 = vadd.f32 %v522, %v523
    %v525 = vrot.slane %v524, 1
    %v526 = vadd.f32 %v524, %v525
    %v535 = vsel %vm214, %v484, %v477
    %v536 = vsel %vm216, %v491, %v535
    %v537 = vsel %vm218, %v498, %v536
    %v538 = vsel %vm220, %v505, %v537
    %v539 = vsel %vm222, %v512, %v538
    %v540 = vsel %vm224, %v519, %v539
    %v541 = vsel %vm226, %v526, %v540
    %543 = vst.msk [vmem:[#allocation7] sm:$0xff] %vm147, %v541
    // Predicated region
    $region18: #{tpu_custom_call.1} parent=1 // pred_check
      _
    $region19: #{tpu_custom_call.1} parent=1 // pred_check_branch
      %545 = sbr.rel (0) target = $region21
    $region20: #{tpu_custom_call.1} parent=1 // pred_region
      %s547 = ssub.s32 128, 32
      %548 = vsyncadd [#allocation4], %s547
      %s549 = sshll.u32 [#allocation7], 4
      %s550 = int_to_ptr.vmem [resolvable:$true] %s549
      %555 = dma.vmem_to_hbm [thread:$0]  %s550, 32, %s2, [#allocation4], 32, 32, 2
    $region21: #{tpu_custom_call.1} parent=1 // pred_fallthru
      _
    // Predicated region
    $region22: #{tpu_custom_call.1} parent=1 // pred_check
      _
    $region23: #{tpu_custom_call.1} parent=1 // pred_check_branch
      %557 = sbr.rel (0) target = $region25
    $region24: #{tpu_custom_call.1} parent=1 // pred_region
      %558 = dma.done [#allocation4], 128
    $region25: #{tpu_custom_call.1} parent=1 // pred_fallthru
      _
    %559 = vsyncpa [#allocation3], 1
    %560 = vsyncpa [#allocation6], 1
    %561 = vsyncpa [#allocation4], 1

</llo_original>
